<compile_context>
chip_gen: v6e
topology: v6e:2x2x1
jax: 0.10.0
libtpu: 0.0.40
codegen_flags: <defaults>
</compile_context>

<pallas_src>
import functools

import jax
import jax.numpy as jnp
from jax import lax
from jax.experimental import pallas as pl
from jax.experimental.pallas import tpu as pltpu


# ----------------------------------------------------------------------------
# Fused Pallas kernel
# ----------------------------------------------------------------------------
def _conv_relu(w_ref, act, ksize, pad):
    """ConvBlock (Conv1d + folded BN/bias + ReLU) on an L-last activation.

    w_ref: (C_out, K*C_in + 1)  BN-folded weights; last column is the shift.
    act:   (C_in, L_in)         activation value, length on lanes.
    returns (C_out, L_out), L_out = L_in + 2*pad - K + 1   (stride 1).
    """
    c, l_in = act.shape
    l_out = l_in + 2 * pad - ksize + 1
    if pad > 0:
        z = jnp.zeros((c, pad), jnp.float32)
        act = jnp.concatenate([z, act, z], axis=1)          # zero pad on lanes
    # Stack the K shifted taps along the contraction (sublane) axis so the
    # whole conv is a single MXU matmul with contraction dim K*C_in (+1 for
    # the folded shift, which multiplies a constant ones-row).
    taps = [act[:, t:t + l_out] for t in range(ksize)]
    taps.append(jnp.ones((1, l_out), jnp.float32))
    stacked = jnp.concatenate(taps, axis=0)                 # (K*C_in + 1, L_out)
    y = jnp.dot(w_ref[...], stacked, preferred_element_type=jnp.float32)
    return jnp.maximum(y, 0.0)                              # ReLU epilogue


def _maxpool(act, ksize, pad):
    """MaxPool1d (stride 1) on an L-last activation with -inf padding."""
    c, l_in = act.shape
    l_out = l_in + 2 * pad - ksize + 1
    if pad > 0:
        neg = jnp.full((c, pad), -jnp.inf, jnp.float32)
        act = jnp.concatenate([neg, act, neg], axis=1)
    m = act[:, 0:l_out]
    for t in range(1, ksize):
        m = jnp.maximum(m, act[:, t:t + l_out])
    return m


def _inception_kernel(x_ref, w0_ref, w10_ref, w11_ref, w20_ref, w21_ref,
                      w3_ref, o_ref, *, convs, pool):
    """Whole inception block for one batch element, fully VMEM-resident.

    x_ref : (1, C_in, L)     NCL input tile (length on lanes)
    w*_ref: (C_out, Kin+1)   BN/bias-folded weights per ConvBlock
    o_ref : (1, C_cat, L)    channel-concatenated NCL output
    """
    x = x_ref[0].astype(jnp.float32)                        # (C_in, L)

    # branch 0: 1x1 conv
    b0 = _conv_relu(w0_ref, x, *convs["b0"])
    # branch 1: 1x1 conv -> kxK conv
    b1 = _conv_relu(w11_ref, _conv_relu(w10_ref, x, *convs["b1_0"]),
                    *convs["b1_1"])
    # branch 2: 1x1 conv -> kxK conv
    b2 = _conv_relu(w21_ref, _conv_relu(w20_ref, x, *convs["b2_0"]),
                    *convs["b2_1"])
    # branch 3: maxpool -> 1x1 conv
    b3 = _conv_relu(w3_ref, _maxpool(x, *pool), *convs["b3"])

    # torch.cat([...], dim=1): concat on the channel (sublane) axis.
    o_ref[0] = jnp.concatenate([b0, b1, b2, b3], axis=0).astype(o_ref.dtype)


# ----------------------------------------------------------------------------
# Wrapper: weight folding + pallas_call plumbing
# ----------------------------------------------------------------------------
def _fold_conv_block(p):
    """(w, scale, shift) -> (C_out, K*C_in + 1) with BN scale folded into the
    weights and the shift appended as a trailing column (bias row trick)."""
    w, scale, shift = p                                     # w: (C_out, C_in, K)
    c_out, c_in, k = w.shape
    w_scaled = w * scale[:, None, None]
    w_flat = jnp.transpose(w_scaled, (0, 2, 1)).reshape(c_out, k * c_in)
    return jnp.concatenate([w_flat, shift[:, None]], axis=1).astype(jnp.float32)


def inception_forward(x_ncl, params, config):
    """InceptionModule.forward.  Input/output are PyTorch NCL float32."""
    n, c_in, l = x_ncl.shape
    (c0, k0, s0, p0) = config[0]
    (c10, k10, s10, p10), (c11, k11, s11, p11) = config[1]
    (c20, k20, s20, p20), (c21, k21, s21, p21) = config[2]
    (pk, ps, pp), (c3, k3, s3, p3) = config[3]
    assert all(s == 1 for s in (s0, s10, s11, s20, s21, ps, s3)), \
        "fused kernel supports stride=1 only"  # TODO(synk): strided conv/pool

    def lo(l_in, k, p):
        return l_in + 2 * p - k + 1

    l0 = lo(l, k0, p0)
    l1 = lo(lo(l, k10, p10), k11, p11)
    l2 = lo(lo(l, k20, p20), k21, p21)
    l3 = lo(lo(l, pk, pp), k3, p3)
    assert l0 == l1 == l2 == l3, "branch output lengths must match for concat"
    l_out = l0
    c_cat = c0 + c11 + c21 + c3

    ws = [_fold_conv_block(params[name]) for name in
          ("b0", "b1_0", "b1_1", "b2_0", "b2_1", "b3")]

    kernel = functools.partial(
        _inception_kernel,
        convs=dict(b0=(k0, p0), b1_0=(k10, p10), b1_1=(k11, p11),
                   b2_0=(k20, p20), b2_1=(k21, p21), b3=(k3, p3)),
        pool=(pk, pp),
    )

    w_specs = [pl.BlockSpec(w.shape, lambda i: (0, 0)) for w in ws]
    return pl.pallas_call(
        kernel,
        out_shape=jax.ShapeDtypeStruct((n, c_cat, l_out), jnp.float32),
        grid=(n,),  # one batch element per step; "parallel" -> both v7x TCs
        in_specs=[pl.BlockSpec((1, c_in, l), lambda i: (i, 0, 0))] + w_specs,
        out_specs=pl.BlockSpec((1, c_cat, l_out), lambda i: (i, 0, 0)),
        compiler_params=pltpu.CompilerParams(
            dimension_semantics=("parallel",),
            vmem_limit_bytes=64 * 1024 * 1024,
        ),
    )(x_ncl, *ws)


# ----------------------------------------------------------------------------
# Parameter init (deterministic, synthetic) — BN folded in eval mode
# ----------------------------------------------------------------------------
def make_conv_block_params(key, c_in, c_out, ksize, batch_norm, bias):
    keys = jax.random.split(key, 6)
    fan_in = float(c_in * ksize)
    w = jax.random.normal(keys[0], (c_out, c_in, ksize), jnp.float32) / jnp.sqrt(fan_in)
    b = (0.1 * jax.random.normal(keys[1], (c_out,), jnp.float32)
         if bias else jnp.zeros((c_out,), jnp.float32))
    if batch_norm:
        eps = 1e-5
        gamma = 1.0 + 0.1 * jax.random.normal(keys[2], (c_out,), jnp.float32)
        beta = 0.1 * jax.random.normal(keys[3], (c_out,), jnp.float32)
        r_mean = 0.1 * jax.random.normal(keys[4], (c_out,), jnp.float32)
        r_var = jax.random.uniform(keys[5], (c_out,), jnp.float32, 0.5, 1.5)
        scale = gamma / jnp.sqrt(r_var + eps)          # eval-mode BN fold
        shift = beta + (b - r_mean) * scale
    else:
        scale = jnp.ones((c_out,), jnp.float32)
        shift = b
    return w, scale, shift


def init_inception_params(key, in_channel, config, batch_norm, bias):
    ks = jax.random.split(key, 6)
    p = {}
    p["b0"] = make_conv_block_params(ks[0], in_channel, config[0][0], config[0][1],
                                     batch_norm, bias)
    p["b1_0"] = make_conv_block_params(ks[1], in_channel, config[1][0][0],
                                       config[1][0][1], batch_norm, bias)
    p["b1_1"] = make_conv_block_params(ks[2], config[1][0][0], config[1][1][0],
                                       config[1][1][1], batch_norm, bias)
    p["b2_0"] = make_conv_block_params(ks[3], in_channel, config[2][0][0],
                                       config[2][0][1], batch_norm, bias)
    p["b2_1"] = make_conv_block_params(ks[4], config[2][0][0], config[2][1][0],
                                       config[2][1][1], batch_norm, bias)
    p["b3"] = make_conv_block_params(ks[5], in_channel, config[3][1][0],
                                     config[3][1][1], batch_norm, bias)
    return p


# ----------------------------------------------------------------------------
# Pure-JAX reference (for numerical validation, NCL layout throughout)
# ----------------------------------------------------------------------------
def _ref_conv_block(x_ncl, w_oik, scale, shift, stride, pad):
    y = lax.conv_general_dilated(
        x_ncl, w_oik, window_strides=(stride,), padding=[(pad, pad)],
        dimension_numbers=("NCW", "OIW", "NCW"))
    y = y * scale[None, :, None] + shift[None, :, None]
    return jnp.maximum(y, 0.0)


def _ref_maxpool1d(x_ncl, ksize, stride, pad):
    return lax.reduce_window(
        x_ncl, -jnp.inf, lax.max,
        window_dimensions=(1, 1, ksize), window_strides=(1, 1, stride),
        padding=((0, 0), (0, 0), (pad, pad)))


def _ref_forward(x_ncl, params, config):
    def cb(xx, p, cfg):
        _, k, s, pd = cfg
        w, sc, sh = p
        return _ref_conv_block(xx, w, sc, sh, s, pd)

    o0 = cb(x_ncl, params["b0"], config[0])
    o1 = cb(cb(x_ncl, params["b1_0"], config[1][0]), params["b1_1"], config[1][1])
    o2 = cb(cb(x_ncl, params["b2_0"], config[2][0]), params["b2_1"], config[2][1])
    pk, ps, pp = config[3][0]
    o3 = cb(_ref_maxpool1d(x_ncl, pk, ps, pp), params["b3"], config[3][1])
    return jnp.concatenate([o0, o1, o2, o3], axis=1)


# ----------------------------------------------------------------------------
if __name__ == "__main__":
    # Small inception-1D configuration:
    #   branch_0: 1x1 conv -> 8 ch
    #   branch_1: 1x1 conv -> 4 ch, then k=3 conv -> 8 ch
    #   branch_2: 1x1 conv -> 4 ch, then k=5 conv -> 8 ch
    #   branch_3: maxpool(k=3, s=1, p=1), then 1x1 conv -> 8 ch
    in_channel = 4
    config = [
        (8, 1, 1, 0),
        [(4, 1, 1, 0), (8, 3, 1, 1)],
        [(4, 1, 1, 0), (8, 5, 1, 2)],
        [(3, 1, 1), (8, 1, 1, 0)],
    ]
    batch_norm, bias = True, False

    key = jax.random.PRNGKey(0)
    kx, kp = jax.random.split(key)
    x = jax.random.normal(kx, (2, in_channel, 16), jnp.float32)  # NCL, like PyTorch

    params = init_inception_params(kp, in_channel, config, batch_norm, bias)

    out = inception_forward(x, params, config)
    out = jax.block_until_ready(out)
    assert out.shape == (2, 8 * 4, 16), out.shape

    ref = jax.block_until_ready(_ref_forward(x, params, config))
    assert jnp.allclose(out, ref, atol=1e-4, rtol=1e-4), float(
        jnp.max(jnp.abs(out - ref)))

    print("KERNEL_OK")
</pallas_src>

<mosaic_0001>
module attributes {stable_mosaic.version = 11 : i64} {
  func.func @_inception_kernel(%arg0: i32, %arg1: memref<1x4x16xf32, #tpu.memory_space<vmem>>, %arg2: memref<8x5xf32, #tpu.memory_space<vmem>>, %arg3: memref<4x5xf32, #tpu.memory_space<vmem>>, %arg4: memref<8x13xf32, #tpu.memory_space<vmem>>, %arg5: memref<4x5xf32, #tpu.memory_space<vmem>>, %arg6: memref<8x21xf32, #tpu.memory_space<vmem>>, %arg7: memref<8x5xf32, #tpu.memory_space<vmem>>, %arg8: memref<1x32x16xf32, #tpu.memory_space<vmem>>) attributes {dimension_semantics = [#tpu.dimension_semantics<parallel>], iteration_bounds = array<i64: 2>, scalar_prefetch = 0 : i64, scratch_operands = 0 : i64, tpu.core_type = #tpu.core_type<tc>, window_params = [{transform_indices = @transform_0, window_bounds = array<i64: 1, 4, 16>}, {pipeline_mode = #tpu.pipeline_mode<synchronous>, transform_indices = @transform_1, window_bounds = array<i64: 8, 5>}, {pipeline_mode = #tpu.pipeline_mode<synchronous>, transform_indices = @transform_2, window_bounds = array<i64: 4, 5>}, {pipeline_mode = #tpu.pipeline_mode<synchronous>, transform_indices = @transform_3, window_bounds = array<i64: 8, 13>}, {pipeline_mode = #tpu.pipeline_mode<synchronous>, transform_indices = @transform_4, window_bounds = array<i64: 4, 5>}, {pipeline_mode = #tpu.pipeline_mode<synchronous>, transform_indices = @transform_5, window_bounds = array<i64: 8, 21>}, {pipeline_mode = #tpu.pipeline_mode<synchronous>, transform_indices = @transform_6, window_bounds = array<i64: 8, 5>}, {transform_indices = @transform_7, window_bounds = array<i64: 1, 32, 16>}]} {
    %c0 = arith.constant 0 : index
    %c0_0 = arith.constant 0 : index
    %c0_1 = arith.constant 0 : index
    %0 = vector.load %arg1[%c0, %c0_0, %c0_1] : memref<1x4x16xf32, #tpu.memory_space<vmem>>, vector<1x4x16xf32>
    %1 = vector.shape_cast %0 : vector<1x4x16xf32> to vector<4x16xf32>
    %cst = arith.constant 1.000000e+00 : f32
    %2 = vector.broadcast %cst : f32 to vector<1x16xf32>
    %3 = tpu.concatenate %1, %2 in 0 : vector<4x16xf32>, vector<1x16xf32> -> vector<5x16xf32>
    %c0_2 = arith.constant 0 : index
    %c0_3 = arith.constant 0 : index
    %4 = vector.load %arg2[%c0_2, %c0_3] : memref<8x5xf32, #tpu.memory_space<vmem>>, vector<8x5xf32>
    %cst_4 = arith.constant dense<0.000000e+00> : vector<8x16xf32>
    %5 = tpu.matmul %4, %3, %cst_4 {dimension_numbers = #tpu.dot_dimension_numbers<[1], [0], [0], [1], [0, 0, 1, 1], [], []>} : vector<8x5xf32>, vector<5x16xf32>, vector<8x16xf32> -> vector<8x16xf32>
    %cst_5 = arith.constant 0.000000e+00 : f32
    %6 = vector.broadcast %cst_5 : f32 to vector<8x16xf32>
    %7 = arith.maximumf %5, %6 : vector<8x16xf32>
    %cst_6 = arith.constant 1.000000e+00 : f32
    %8 = vector.broadcast %cst_6 : f32 to vector<1x16xf32>
    %9 = tpu.concatenate %1, %8 in 0 : vector<4x16xf32>, vector<1x16xf32> -> vector<5x16xf32>
    %c0_7 = arith.constant 0 : index
    %c0_8 = arith.constant 0 : index
    %10 = vector.load %arg3[%c0_7, %c0_8] : memref<4x5xf32, #tpu.memory_space<vmem>>, vector<4x5xf32>
    %cst_9 = arith.constant dense<0.000000e+00> : vector<4x16xf32>
    %11 = tpu.matmul %10, %9, %cst_9 {dimension_numbers = #tpu.dot_dimension_numbers<[1], [0], [0], [1], [0, 0, 1, 1], [], []>} : vector<4x5xf32>, vector<5x16xf32>, vector<4x16xf32> -> vector<4x16xf32>
    %cst_10 = arith.constant 0.000000e+00 : f32
    %12 = vector.broadcast %cst_10 : f32 to vector<4x16xf32>
    %13 = arith.maximumf %11, %12 : vector<4x16xf32>
    %cst_11 = arith.constant 0.000000e+00 : f32
    %14 = vector.broadcast %cst_11 : f32 to vector<4x1xf32>
    %15 = tpu.concatenate %14, %13, %14 in 1 : vector<4x1xf32>, vector<4x16xf32>, vector<4x1xf32> -> vector<4x18xf32>
    %16 = vector.extract_strided_slice %15 {offsets = [0, 0], sizes = [4, 16], strides = [1, 1]} : vector<4x18xf32> to vector<4x16xf32>
    %17 = vector.extract_strided_slice %15 {offsets = [0, 1], sizes = [4, 16], strides = [1, 1]} : vector<4x18xf32> to vector<4x16xf32>
    %18 = vector.extract_strided_slice %15 {offsets = [0, 2], sizes = [4, 16], strides = [1, 1]} : vector<4x18xf32> to vector<4x16xf32>
    %cst_12 = arith.constant 1.000000e+00 : f32
    %19 = vector.broadcast %cst_12 : f32 to vector<1x16xf32>
    %20 = tpu.concatenate %16, %17, %18, %19 in 0 : vector<4x16xf32>, vector<4x16xf32>, vector<4x16xf32>, vector<1x16xf32> -> vector<13x16xf32>
    %c0_13 = arith.constant 0 : index
    %c0_14 = arith.constant 0 : index
    %21 = vector.load %arg4[%c0_13, %c0_14] : memref<8x13xf32, #tpu.memory_space<vmem>>, vector<8x13xf32>
    %cst_15 = arith.constant dense<0.000000e+00> : vector<8x16xf32>
    %22 = tpu.matmul %21, %20, %cst_15 {dimension_numbers = #tpu.dot_dimension_numbers<[1], [0], [0], [1], [0, 0, 1, 1], [], []>} : vector<8x13xf32>, vector<13x16xf32>, vector<8x16xf32> -> vector<8x16xf32>
    %cst_16 = arith.constant 0.000000e+00 : f32
    %23 = vector.broadcast %cst_16 : f32 to vector<8x16xf32>
    %24 = arith.maximumf %22, %23 : vector<8x16xf32>
    %cst_17 = arith.constant 1.000000e+00 : f32
    %25 = vector.broadcast %cst_17 : f32 to vector<1x16xf32>
    %26 = tpu.concatenate %1, %25 in 0 : vector<4x16xf32>, vector<1x16xf32> -> vector<5x16xf32>
    %c0_18 = arith.constant 0 : index
    %c0_19 = arith.constant 0 : index
    %27 = vector.load %arg5[%c0_18, %c0_19] : memref<4x5xf32, #tpu.memory_space<vmem>>, vector<4x5xf32>
    %cst_20 = arith.constant dense<0.000000e+00> : vector<4x16xf32>
    %28 = tpu.matmul %27, %26, %cst_20 {dimension_numbers = #tpu.dot_dimension_numbers<[1], [0], [0], [1], [0, 0, 1, 1], [], []>} : vector<4x5xf32>, vector<5x16xf32>, vector<4x16xf32> -> vector<4x16xf32>
    %cst_21 = arith.constant 0.000000e+00 : f32
    %29 = vector.broadcast %cst_21 : f32 to vector<4x16xf32>
    %30 = arith.maximumf %28, %29 : vector<4x16xf32>
    %cst_22 = arith.constant 0.000000e+00 : f32
    %31 = vector.broadcast %cst_22 : f32 to vector<4x2xf32>
    %32 = tpu.concatenate %31, %30, %31 in 1 : vector<4x2xf32>, vector<4x16xf32>, vector<4x2xf32> -> vector<4x20xf32>
    %33 = vector.extract_strided_slice %32 {offsets = [0, 0], sizes = [4, 16], strides = [1, 1]} : vector<4x20xf32> to vector<4x16xf32>
    %34 = vector.extract_strided_slice %32 {offsets = [0, 1], sizes = [4, 16], strides = [1, 1]} : vector<4x20xf32> to vector<4x16xf32>
    %35 = vector.extract_strided_slice %32 {offsets = [0, 2], sizes = [4, 16], strides = [1, 1]} : vector<4x20xf32> to vector<4x16xf32>
    %36 = vector.extract_strided_slice %32 {offsets = [0, 3], sizes = [4, 16], strides = [1, 1]} : vector<4x20xf32> to vector<4x16xf32>
    %37 = vector.extract_strided_slice %32 {offsets = [0, 4], sizes = [4, 16], strides = [1, 1]} : vector<4x20xf32> to vector<4x16xf32>
    %cst_23 = arith.constant 1.000000e+00 : f32
    %38 = vector.broadcast %cst_23 : f32 to vector<1x16xf32>
    %39 = tpu.concatenate %33, %34, %35, %36, %37, %38 in 0 : vector<4x16xf32>, vector<4x16xf32>, vector<4x16xf32>, vector<4x16xf32>, vector<4x16xf32>, vector<1x16xf32> -> vector<21x16xf32>
    %c0_24 = arith.constant 0 : index
    %c0_25 = arith.constant 0 : index
    %40 = vector.load %arg6[%c0_24, %c0_25] : memref<8x21xf32, #tpu.memory_space<vmem>>, vector<8x21xf32>
    %cst_26 = arith.constant dense<0.000000e+00> : vector<8x16xf32>
    %41 = tpu.matmul %40, %39, %cst_26 {dimension_numbers = #tpu.dot_dimension_numbers<[1], [0], [0], [1], [0, 0, 1, 1], [], []>} : vector<8x21xf32>, vector<21x16xf32>, vector<8x16xf32> -> vector<8x16xf32>
    %cst_27 = arith.constant 0.000000e+00 : f32
    %42 = vector.broadcast %cst_27 : f32 to vector<8x16xf32>
    %43 = arith.maximumf %41, %42 : vector<8x16xf32>
    %cst_28 = arith.constant 0xFF800000 : f32
    %44 = vector.broadcast %cst_28 : f32 to vector<4x1xf32>
    %45 = tpu.concatenate %44, %1, %44 in 1 : vector<4x1xf32>, vector<4x16xf32>, vector<4x1xf32> -> vector<4x18xf32>
    %46 = vector.extract_strided_slice %45 {offsets = [0, 0], sizes = [4, 16], strides = [1, 1]} : vector<4x18xf32> to vector<4x16xf32>
    %47 = vector.extract_strided_slice %45 {offsets = [0, 1], sizes = [4, 16], strides = [1, 1]} : vector<4x18xf32> to vector<4x16xf32>
    %48 = arith.maximumf %46, %47 : vector<4x16xf32>
    %49 = vector.extract_strided_slice %45 {offsets = [0, 2], sizes = [4, 16], strides = [1, 1]} : vector<4x18xf32> to vector<4x16xf32>
    %50 = arith.maximumf %48, %49 : vector<4x16xf32>
    %cst_29 = arith.constant 1.000000e+00 : f32
    %51 = vector.broadcast %cst_29 : f32 to vector<1x16xf32>
    %52 = tpu.concatenate %50, %51 in 0 : vector<4x16xf32>, vector<1x16xf32> -> vector<5x16xf32>
    %c0_30 = arith.constant 0 : index
    %c0_31 = arith.constant 0 : index
    %53 = vector.load %arg7[%c0_30, %c0_31] : memref<8x5xf32, #tpu.memory_space<vmem>>, vector<8x5xf32>
    %cst_32 = arith.constant dense<0.000000e+00> : vector<8x16xf32>
    %54 = tpu.matmul %53, %52, %cst_32 {dimension_numbers = #tpu.dot_dimension_numbers<[1], [0], [0], [1], [0, 0, 1, 1], [], []>} : vector<8x5xf32>, vector<5x16xf32>, vector<8x16xf32> -> vector<8x16xf32>
    %cst_33 = arith.constant 0.000000e+00 : f32
    %55 = vector.broadcast %cst_33 : f32 to vector<8x16xf32>
    %56 = arith.maximumf %54, %55 : vector<8x16xf32>
    %57 = tpu.concatenate %7, %24, %43, %56 in 0 : vector<8x16xf32>, vector<8x16xf32>, vector<8x16xf32>, vector<8x16xf32> -> vector<32x16xf32>
    %c0_34 = arith.constant 0 : index
    %c0_35 = arith.constant 0 : index
    %c0_36 = arith.constant 0 : index
    %58 = vector.load %arg8[%c0_34, %c0_35, %c0_36] : memref<1x32x16xf32, #tpu.memory_space<vmem>>, vector<1x32x16xf32>
    %59 = vector.shape_cast %58 : vector<1x32x16xf32> to vector<32x16xf32>
    %60 = vector.shape_cast %57 : vector<32x16xf32> to vector<1x32x16xf32>
    tpu.vector_store %arg8[%c0_34, %c0_35, %c0_36], %60 {strides = array<i32>} : memref<1x32x16xf32, #tpu.memory_space<vmem>>, vector<1x32x16xf32>,
    return
  }
  func.func @transform_0(%arg0: i32) -> (i32, i32, i32) {
    %c0_i32 = arith.constant 0 : i32
    %c0_i32_0 = arith.constant 0 : i32
    %c0_i32_1 = arith.constant 0 : i32
    return %arg0, %c0_i32, %c0_i32_0 : i32, i32, i32
  }
  func.func @transform_1(%arg0: i32) -> (i32, i32) {
    %c0_i32 = arith.constant 0 : i32
    %c0_i32_0 = arith.constant 0 : i32
    %c0_i32_1 = arith.constant 0 : i32
    return %c0_i32, %c0_i32_0 : i32, i32
  }
  func.func @transform_2(%arg0: i32) -> (i32, i32) {
    %c0_i32 = arith.constant 0 : i32
    %c0_i32_0 = arith.constant 0 : i32
    %c0_i32_1 = arith.constant 0 : i32
    return %c0_i32, %c0_i32_0 : i32, i32
  }
  func.func @transform_3(%arg0: i32) -> (i32, i32) {
    %c0_i32 = arith.constant 0 : i32
    %c0_i32_0 = arith.constant 0 : i32
    %c0_i32_1 = arith.constant 0 : i32
    return %c0_i32, %c0_i32_0 : i32, i32
  }
  func.func @transform_4(%arg0: i32) -> (i32, i32) {
    %c0_i32 = arith.constant 0 : i32
    %c0_i32_0 = arith.constant 0 : i32
    %c0_i32_1 = arith.constant 0 : i32
    return %c0_i32, %c0_i32_0 : i32, i32
  }
  func.func @transform_5(%arg0: i32) -> (i32, i32) {
    %c0_i32 = arith.constant 0 : i32
    %c0_i32_0 = arith.constant 0 : i32
    %c0_i32_1 = arith.constant 0 : i32
    return %c0_i32, %c0_i32_0 : i32, i32
  }
  func.func @transform_6(%arg0: i32) -> (i32, i32) {
    %c0_i32 = arith.constant 0 : i32
    %c0_i32_0 = arith.constant 0 : i32
    %c0_i32_1 = arith.constant 0 : i32
    return %c0_i32, %c0_i32_0 : i32, i32
  }
  func.func @transform_7(%arg0: i32) -> (i32, i32, i32) {
    %c0_i32 = arith.constant 0 : i32
    %c0_i32_0 = arith.constant 0 : i32
    %c0_i32_1 = arith.constant 0 : i32
    return %arg0, %c0_i32, %c0_i32_0 : i32, i32, i32
  }
}

</mosaic_0001>

<llo_original>
// kernel: tpu_custom_call.1
$region0: #{tpu_custom_call.1}
  #allocation0 [shape = 'u32[]', space=smem, size = 0x4, offset = 0x4, fixed_abs, tag = 'smem constant byte address 0x4 - core index']
  #allocation1 [shape = 'u32[144,128]{1,0:T(1,128)}', space=vmem, size = 0x12000, scoped, tag = 'internal scratch']
  %s0 = inlined_call_operand.hbm [shape: f32[2,4,16], index: 0, kind: input, shape index: {}]
  %s1 = inlined_call_operand.hbm [shape: f32[8,5], index: 1, kind: input, shape index: {}]
  %s2 = inlined_call_operand.hbm [shape: f32[4,5], index: 2, kind: input, shape index: {}]
  %s3 = inlined_call_operand.hbm [shape: f32[8,13], index: 3, kind: input, shape index: {}]
  %s4 = inlined_call_operand.hbm [shape: f32[4,5], index: 4, kind: input, shape index: {}]
  %s5 = inlined_call_operand.vmem [shape: f32[8,21], index: 5, kind: input, shape index: {}]
  %s6 = inlined_call_operand.hbm [shape: f32[8,5], index: 6, kind: input, shape index: {}]
  %s7 = inlined_call_operand.vmem [shape: f32[2,32,16], index: 7, kind: output, shape index: {}]
  %s8 = sld [smem:[#allocation0]]
  $region85: #{tpu_custom_call.1} parent=0
    _
  %s10 = ssub.s32 1, %s8
  %s11 = scalar_select 0, %s10, %s8
  $region1: #{tpu_custom_call.1} parent=0
    #allocation2 [shape = 'u8[4096]{0}', space=vmem, size = 0x1000, scoped, tag = 'input window, operand 0']
    #allocation3 [shape = 's32[2]{0}', space=sflag, size = 0x8, scoped, tag = 'scoped memory for tpu_custom_call.1']
    #allocation4 [shape = 'u8[4096]{0}', space=vmem, size = 0x1000, scoped, tag = 'input window, operand 1, single buffered']
    #allocation5 [shape = 's32[1]{0}', space=sflag, size = 0x4, scoped, tag = 'scoped memory for tpu_custom_call.1']
    #allocation6 [shape = 'u8[2048]{0}', space=vmem, size = 0x800, scoped, tag = 'input window, operand 2, single buffered']
    #allocation7 [shape = 'u8[4096]{0}', space=vmem, size = 0x1000, scoped, tag = 'input window, operand 3, single buffered']
    #allocation8 [shape = 's32[1]{0}', space=sflag, size = 0x4, scoped, tag = 'scoped memory for tpu_custom_call.1']
    #allocation9 [shape = 'u8[2048]{0}', space=vmem, size = 0x800, scoped, tag = 'input window, operand 4, single buffered']
    #allocation10 [shape = 'u8[4096]{0}', space=vmem, size = 0x1000, scoped, tag = 'input window, operand 6, single buffered']
    #allocation11 [shape = 's32[1]{0}', space=sflag, size = 0x4, scoped, tag = 'scoped memory for tpu_custom_call.1']
    %12 = vsyncpa [#allocation3], 0
    %s13 = scalar_lea.sflag [#allocation3], 1
    %14 = vsyncpa %s13, 0
    %15 = vsyncpa [#allocation5], 0
    %16 = vsyncpa [#allocation8], 0
    %17 = vsyncpa [#allocation11], 0
    loop: start=0, step=1, limit=4
    $region2: #{tpu_custom_call.1} parent=1 // loop_pre_header
      _
    $region3: #{tpu_custom_call.1} parent=1 // loop_header
      %s19 = sphi 0, %s23
      %p20 = scmp.ge.s32.totalorder %s19, 4
      %s29 = sphi 0, %s31
      %s32 = sphi 0, %s29
      %s33 = sphi 0, %s32
      %s49 = sphi 0, %s33
      %s53 = sphi 0, %s53
      %s55 = sphi 0, %s53
      %s56 = sphi 0, %s55
      %s70 = sphi 0, %s56
      %s74 = sphi 0, %s74
      %s76 = sphi 0, %s74
      %s77 = sphi 0, %s76
      %s91 = sphi 0, %s77
      %s95 = sphi 0, %s95
      %s97 = sphi 0, %s95
      %s98 = sphi 0, %s97
      %s112 = sphi 0, %s98
      %s116 = sphi 0, %s116
      %s118 = sphi 0, %s116
      %s119 = sphi 0, %s118
      %s133 = sphi 0, %s119
      %s137 = sphi 0, %s137
      %s139 = sphi 0, %s137
      %s140 = sphi 0, %s139
      %s154 = sphi 0, %s140
      %s158 = sphi 0, %s158
      %s160 = sphi 0, %s158
      %s161 = sphi 0, %s160
      %s175 = sphi 0, %s161
      %s181 = sphi 0, %s183
      %s184 = sphi 0, %s181
      %s185 = sphi 0, %s184
      %s201 = sphi 0, %s185
    $region4: #{tpu_custom_call.1} parent=1 // loop_header_branch
      %22 = sbr.rel (%p20) target = $region8
    $region5: #{tpu_custom_call.1} parent=1 // loop_body
      %s24 = ssub.s32 %s19, 1
      %s25 = ssub.s32 %s19, 2
      %s26 = sadd.s32 %s19, 1
      %s27 = ssub.s32 %s19, %s26
      %p28 = scmp.eq.s32.totalorder %s27, 0
      %s30 = sadd.s32 %s29, 1
      %s31 = scalar_select %p28, %s29, %s30
      %p34 = pneg %p28
      %p35 = scmp.eq.s32.totalorder %s19, 1
      %p36 = por %p34, %p35
      %p37 = scmp.ne.s32.totalorder %s29, %s32
      %p38 = scmp.eq.s32.totalorder %s19, 0
      %p39 = por %p37, %p38
      %p40 = scmp.ne.s32.totalorder %s29, %s32
      %p41 = scmp.eq.s32.totalorder %s24, 1
      %p42 = por %p40, %p41
      %p43 = scmp.ne.s32.totalorder %s32, %s33
      %p44 = scmp.eq.s32.totalorder %s24, 0
      %p45 = por %p43, %p44
      %p46 = scmp.ne.s32.totalorder %s32, %s33
      %p47 = scmp.eq.s32.totalorder %s25, 1
      %p48 = por %p46, %p47
      %p50 = scmp.ne.s32.totalorder %s33, %s49
      %p51 = scmp.eq.s32.totalorder %s25, 0
      %p52 = por %p50, %p51
      %s54 = sadd.s32 %s53, 1
      %p57 = scmp.eq.s32.totalorder %s19, 1
      %p58 = scmp.ne.s32.totalorder %s53, %s55
      %p59 = scmp.eq.s32.totalorder %s19, 0
      %p60 = por %p58, %p59
      %p61 = scmp.ne.s32.totalorder %s53, %s55
      %p62 = scmp.eq.s32.totalorder %s24, 1
      %p63 = por %p61, %p62
      %p64 = scmp.ne.s32.totalorder %s55, %s56
      %p65 = scmp.eq.s32.totalorder %s24, 0
      %p66 = por %p64, %p65
      %p67 = scmp.ne.s32.totalorder %s55, %s56
      %p68 = scmp.eq.s32.totalorder %s25, 1
      %p69 = por %p67, %p68
      %p71 = scmp.ne.s32.totalorder %s56, %s70
      %p72 = scmp.eq.s32.totalorder %s25, 0
      %p73 = por %p71, %p72
      %s75 = sadd.s32 %s74, 1
      %p78 = scmp.eq.s32.totalorder %s19, 1
      %p79 = scmp.ne.s32.totalorder %s74, %s76
      %p80 = scmp.eq.s32.totalorder %s19, 0
      %p81 = por %p79, %p80
      %p82 = scmp.ne.s32.totalorder %s74, %s76
      %p83 = scmp.eq.s32.totalorder %s24, 1
      %p84 = por %p82, %p83
      %p85 = scmp.ne.s32.totalorder %s76, %s77
      %p86 = scmp.eq.s32.totalorder %s24, 0
      %p87 = por %p85, %p86
      %p88 = scmp.ne.s32.totalorder %s76, %s77
      %p89 = scmp.eq.s32.totalorder %s25, 1
      %p90 = por %p88, %p89
      %p92 = scmp.ne.s32.totalorder %s77, %s91
      %p93 = scmp.eq.s32.totalorder %s25, 0
      %p94 = por %p92, %p93
      %s96 = sadd.s32 %s95, 1
      %p99 = scmp.eq.s32.totalorder %s19, 1
      %p100 = scmp.ne.s32.totalorder %s95, %s97
      %p101 = scmp.eq.s32.totalorder %s19, 0
      %p102 = por %p100, %p101
      %p103 = scmp.ne.s32.totalorder %s95, %s97
      %p104 = scmp.eq.s32.totalorder %s24, 1
      %p105 = por %p103, %p104
      %p106 = scmp.ne.s32.totalorder %s97, %s98
      %p107 = scmp.eq.s32.totalorder %s24, 0
      %p108 = por %p106, %p107
      %p109 = scmp.ne.s32.totalorder %s97, %s98
      %p110 = scmp.eq.s32.totalorder %s25, 1
      %p111 = por %p109, %p110
      %p113 = scmp.ne.s32.totalorder %s98, %s112
      %p114 = scmp.eq.s32.totalorder %s25, 0
      %p115 = por %p113, %p114
      %s117 = sadd.s32 %s116, 1
      %p120 = scmp.eq.s32.totalorder %s19, 1
      %p121 = scmp.ne.s32.totalorder %s116, %s118
      %p122 = scmp.eq.s32.totalorder %s19, 0
      %p123 = por %p121, %p122
      %p124 = scmp.ne.s32.totalorder %s116, %s118
      %p125 = scmp.eq.s32.totalorder %s24, 1
      %p126 = por %p124, %p125
      %p127 = scmp.ne.s32.totalorder %s118, %s119
      %p128 = scmp.eq.s32.totalorder %s24, 0
      %p129 = por %p127, %p128
      %p130 = scmp.ne.s32.totalorder %s118, %s119
      %p131 = scmp.eq.s32.totalorder %s25, 1
      %p132 = por %p130, %p131
      %p134 = scmp.ne.s32.totalorder %s119, %s133
      %p135 = scmp.eq.s32.totalorder %s25, 0
      %p136 = por %p134, %p135
      %s138 = sadd.s32 %s137, 1
      %p141 = scmp.eq.s32.totalorder %s19, 1
      %p142 = scmp.ne.s32.totalorder %s137, %s139
      %p143 = scmp.eq.s32.totalorder %s19, 0
      %p144 = por %p142, %p143
      %p145 = scmp.ne.s32.totalorder %s137, %s139
      %p146 = scmp.eq.s32.totalorder %s24, 1
      %p147 = por %p145, %p146
      %p148 = scmp.ne.s32.totalorder %s139, %s140
      %p149 = scmp.eq.s32.totalorder %s24, 0
      %p150 = por %p148, %p149
      %p151 = scmp.ne.s32.totalorder %s139, %s140
      %p152 = scmp.eq.s32.totalorder %s25, 1
      %p153 = por %p151, %p152
      %p155 = scmp.ne.s32.totalorder %s140, %s154
      %p156 = scmp.eq.s32.totalorder %s25, 0
      %p157 = por %p155, %p156
      %s159 = sadd.s32 %s158, 1
      %p162 = scmp.eq.s32.totalorder %s19, 1
      %p163 = scmp.ne.s32.totalorder %s158, %s160
      %p164 = scmp.eq.s32.totalorder %s19, 0
      %p165 = por %p163, %p164
      %p166 = scmp.ne.s32.totalorder %s158, %s160
      %p167 = scmp.eq.s32.totalorder %s24, 1
      %p168 = por %p166, %p167
      %p169 = scmp.ne.s32.totalorder %s160, %s161
      %p170 = scmp.eq.s32.totalorder %s24, 0
      %p171 = por %p169, %p170
      %p172 = scmp.ne.s32.totalorder %s160, %s161
      %p173 = scmp.eq.s32.totalorder %s25, 1
      %p174 = por %p172, %p173
      %p176 = scmp.ne.s32.totalorder %s161, %s175
      %p177 = scmp.eq.s32.totalorder %s25, 0
      %p178 = por %p176, %p177
      %s179 = ssub.s32 %s19, %s26
      %p180 = scmp.eq.s32.totalorder %s179, 0
      %s182 = sadd.s32 %s181, 1
      %s183 = scalar_select %p180, %s181, %s182
      %p186 = pneg %p180
      %p187 = scmp.eq.s32.totalorder %s19, 1
      %p188 = por %p186, %p187
      %p189 = scmp.ne.s32.totalorder %s181, %s184
      %p190 = scmp.eq.s32.totalorder %s19, 0
      %p191 = por %p189, %p190
      %p192 = scmp.ne.s32.totalorder %s181, %s184
      %p193 = scmp.eq.s32.totalorder %s24, 1
      %p194 = por %p192, %p193
      %p195 = scmp.ne.s32.totalorder %s184, %s185
      %p196 = scmp.eq.s32.totalorder %s24, 0
      %p197 = por %p195, %p196
      %p198 = scmp.ne.s32.totalorder %s184, %s185
      %p199 = scmp.eq.s32.totalorder %s25, 1
      %p200 = por %p198, %p199
      %p202 = scmp.ne.s32.totalorder %s185, %s201
      %p203 = scmp.eq.s32.totalorder %s25, 0
      %p204 = por %p202, %p203
      %p205 = scmp.le.s32.totalorder 1, %s19
      %p206 = scmp.lt.s32.totalorder %s19, 3
      %p207 = pnand %p205, %p206
      %p208 = pneg %p207
      // Predicated region
      $region9: #{tpu_custom_call.1} parent=5 // pred_check
        _
      $region10: #{tpu_custom_call.1} parent=5 // pred_check_branch
        %210 = sbr.rel (%p207) target = $region12
      $region11: #{tpu_custom_call.1} parent=5 // pred_region
        %s211 = ssub.s32 %s19, 1
        // Predicated region
        $region13: #{tpu_custom_call.1} parent=11 // pred_check
          %p212 = pneg %p66
        $region14: #{tpu_custom_call.1} parent=11 // pred_check_branch
          %214 = sbr.rel (%p212) target = $region16
        $region15: #{tpu_custom_call.1} parent=11 // pred_region
          %s216 = ssub.s32 128, 128
          %217 = vsyncadd [#allocation5], %s216
          %s219 = sshll.u32 [#allocation4], 4
          %s220 = int_to_ptr.vmem [resolvable:$true] %s219
          %222 = dma.hbm_to_vmem [thread:$0]  %s1, 128, %s220, [#allocation5]
        $region16: #{tpu_custom_call.1} parent=11 // pred_fallthru
          _
        // Predicated region
        $region17: #{tpu_custom_call.1} parent=11 // pred_check
          %p223 = pneg %p87
        $region18: #{tpu_custom_call.1} parent=11 // pred_check_branch
          %225 = sbr.rel (%p223) target = $region20
        $region19: #{tpu_custom_call.1} parent=11 // pred_region
          %s227 = ssub.s32 64, 64
          %228 = vsyncadd [#allocation5], %s227
          %s230 = sshll.u32 [#allocation6], 4
          %s231 = int_to_ptr.vmem [resolvable:$true] %s230
          %233 = dma.hbm_to_vmem [thread:$0]  %s2, 64, %s231, [#allocation5]
        $region20: #{tpu_custom_call.1} parent=11 // pred_fallthru
          _
        // Predicated region
        $region21: #{tpu_custom_call.1} parent=11 // pred_check
          %p234 = pneg %p108
        $region22: #{tpu_custom_call.1} parent=11 // pred_check_branch
          %236 = sbr.rel (%p234) target = $region24
        $region23: #{tpu_custom_call.1} parent=11 // pred_region
          %s238 = ssub.s32 128, 128
          %239 = vsyncadd [#allocation8], %s238
          %s241 = sshll.u32 [#allocation7], 4
          %s242 = int_to_ptr.vmem [resolvable:$true] %s241
          %244 = dma.hbm_to_vmem [thread:$0]  %s3, 128, %s242, [#allocation8]
        $region24: #{tpu_custom_call.1} parent=11 // pred_fallthru
          _
        // Predicated region
        $region25: #{tpu_custom_call.1} parent=11 // pred_check
          %p245 = pneg %p129
        $region26: #{tpu_custom_call.1} parent=11 // pred_check_branch
          %247 = sbr.rel (%p245) target = $region28
        $region27: #{tpu_custom_call.1} parent=11 // pred_region
          %s249 = ssub.s32 64, 64
          %250 = vsyncadd [#allocation8], %s249
          %s252 = sshll.u32 [#allocation9], 4
          %s253 = int_to_ptr.vmem [resolvable:$true] %s252
          %255 = dma.hbm_to_vmem [thread:$0]  %s4, 64, %s253, [#allocation8]
        $region28: #{tpu_custom_call.1} parent=11 // pred_fallthru
          _
        // Predicated region
        $region29: #{tpu_custom_call.1} parent=11 // pred_check
          %p256 = pneg %p150
        $region30: #{tpu_custom_call.1} parent=11 // pred_check_branch
          %258 = sbr.rel (%p256) target = $region32
        $region31: #{tpu_custom_call.1} parent=11 // pred_region
          _
        $region32: #{tpu_custom_call.1} parent=11 // pred_fallthru
          _
        // Predicated region
        $region33: #{tpu_custom_call.1} parent=11 // pred_check
          %p259 = pneg %p171
        $region34: #{tpu_custom_call.1} parent=11 // pred_check_branch
          %261 = sbr.rel (%p259) target = $region36
        $region35: #{tpu_custom_call.1} parent=11 // pred_region
          %s263 = ssub.s32 128, 128
          %264 = vsyncadd [#allocation11], %s263
          %s266 = sshll.u32 [#allocation10], 4
          %s267 = int_to_ptr.vmem [resolvable:$true] %s266
          %269 = dma.hbm_to_vmem [thread:$0]  %s6, 128, %s267, [#allocation11]
        $region36: #{tpu_custom_call.1} parent=11 // pred_fallthru
          _
      $region12: #{tpu_custom_call.1} parent=5 // pred_fallthru
        _
      %p270 = scmp.lt.s32.totalorder %s19, 2
      // Predicated region
      $region37: #{tpu_custom_call.1} parent=5 // pred_check
        %p271 = pneg %p270
      $region38: #{tpu_custom_call.1} parent=5 // pred_check_branch
        %273 = sbr.rel (%p271) target = $region40
      $region39: #{tpu_custom_call.1} parent=5 // pred_region
        // Predicated region
        $region41: #{tpu_custom_call.1} parent=39 // pred_check
          %p274 = pneg %p39
        $region42: #{tpu_custom_call.1} parent=39 // pred_check_branch
          %276 = sbr.rel (%p274) target = $region44
        $region43: #{tpu_custom_call.1} parent=39 // pred_region
          %s277 = sand.u32 %s29, 1
          %s278 = scalar_lea.sflag [#allocation3], %s277
          %s279 = sand.u32 %s29, 1
          %s280 = smul.addr %s279, 4
          %s281 = scalar_lea.vmem [#allocation2], %s280
          %s283 = ssub.s32 64, 64
          %284 = vsyncadd %s278, %s283
          %s285 = smul.addr %s19, 64
          %s286 = scalar_lea.hbm %s0, %s285
          %s288 = sshll.u32 %s281, 4
          %s289 = int_to_ptr.vmem [resolvable:$true] %s288
          %291 = dma.hbm_to_vmem [thread:$0]  %s286, 64, %s289, %s278
        $region44: #{tpu_custom_call.1} parent=39 // pred_fallthru
          _
      $region40: #{tpu_custom_call.1} parent=5 // pred_fallthru
        _
      %p292 = scmp.le.s32.totalorder 1, %s19
      %p293 = scmp.lt.s32.totalorder %s19, 3
      %p294 = pnand %p292, %p293
      %p295 = pneg %p294
      // Predicated region
      $region45: #{tpu_custom_call.1} parent=5 // pred_check
        _
      $region46: #{tpu_custom_call.1} parent=5 // pred_check_branch
        %297 = sbr.rel (%p294) target = $region48
      $region47: #{tpu_custom_call.1} parent=5 // pred_region
        %s298 = ssub.s32 %s19, 1
        %s299 = sand.u32 %s32, 1
        %s300 = scalar_lea.sflag [#allocation3], %s299
        %s301 = sand.u32 %s32, 1
        %s302 = smul.addr %s301, 4
        %s303 = scalar_lea.vmem [#allocation2], %s302
        // Predicated region
        $region49: #{tpu_custom_call.1} parent=47 // pred_check
          %p304 = pneg %p45
        $region50: #{tpu_custom_call.1} parent=47 // pred_check_branch
          %306 = sbr.rel (%p304) target = $region52
        $region51: #{tpu_custom_call.1} parent=47 // pred_region
          %307 = dma.done %s300, 64
        $region52: #{tpu_custom_call.1} parent=47 // pred_fallthru
          _
        // Predicated region
        $region53: #{tpu_custom_call.1} parent=47 // pred_check
          %p308 = pneg %p66
        $region54: #{tpu_custom_call.1} parent=47 // pred_check_branch
          %310 = sbr.rel (%p308) target = $region56
        $region55: #{tpu_custom_call.1} parent=47 // pred_region
          %311 = dma.done [#allocation5], 128
        $region56: #{tpu_custom_call.1} parent=47 // pred_fallthru
          _
        // Predicated region
        $region57: #{tpu_custom_call.1} parent=47 // pred_check
          %p312 = pneg %p87
        $region58: #{tpu_custom_call.1} parent=47 // pred_check_branch
          %314 = sbr.rel (%p312) target = $region60
        $region59: #{tpu_custom_call.1} parent=47 // pred_region
          %315 = dma.done [#allocation5], 64
        $region60: #{tpu_custom_call.1} parent=47 // pred_fallthru
          _
        // Predicated region
        $region61: #{tpu_custom_call.1} parent=47 // pred_check
          %p316 = pneg %p108
        $region62: #{tpu_custom_call.1} parent=47 // pred_check_branch
          %318 = sbr.rel (%p316) target = $region64
        $region63: #{tpu_custom_call.1} parent=47 // pred_region
          %319 = dma.done [#allocation8], 128
        $region64: #{tpu_custom_call.1} parent=47 // pred_fallthru
          _
        // Predicated region
        $region65: #{tpu_custom_call.1} parent=47 // pred_check
          %p320 = pneg %p129
        $region66: #{tpu_custom_call.1} parent=47 // pred_check_branch
          %322 = sbr.rel (%p320) target = $region68
        $region67: #{tpu_custom_call.1} parent=47 // pred_region
          %323 = dma.done [#allocation8], 64
        $region68: #{tpu_custom_call.1} parent=47 // pred_fallthru
          _
        // Predicated region
        $region69: #{tpu_custom_call.1} parent=47 // pred_check
          %p324 = pneg %p171
        $region70: #{tpu_custom_call.1} parent=47 // pred_check_branch
          %326 = sbr.rel (%p324) target = $region72
        $region71: #{tpu_custom_call.1} parent=47 // pred_region
          %327 = dma.done [#allocation11], 128
        $region72: #{tpu_custom_call.1} parent=47 // pred_fallthru
          _
        %s328 = sand.u32 %s32, 1
        %s329 = scalar_lea.sflag [#allocation3], %s328
        %s330 = sand.u32 %s32, 1
        %s331 = smul.addr %s330, 4
        %s332 = scalar_lea.vmem [#allocation2], %s331
        %p333 = pneg %p45
        %p334 = pneg %p42
        %p335 = pneg %p66
        %p336 = pneg %p63
        %p337 = pneg %p87
        %p338 = pneg %p84
        %p339 = pneg %p108
        %p340 = pneg %p105
        %p341 = pneg %p129
        %p342 = pneg %p126
        %p343 = pneg %p150
        %p344 = pneg %p147
        %p345 = pneg %p171
        %p346 = pneg %p168
        %p347 = pneg %p197
        %p348 = pneg %p194
        %p349 = scmp.lt.s32.totalorder %s24, 1
        %s350 = scalar_select %p349, %s24, 1
        %s351 = smul.addr %s350, 4
        %s352 = smul.addr %s351, 8
        %s353 = scalar_lea.vmem %s7, %s352
        %p354 = scmp.lt.s32.totalorder %s24, 1
        %s355 = scalar_select %p354, %s24, 1
        %s356 = smul.addr %s355, 4
        %s357 = smul.addr %s356, 8
        %s358 = scalar_lea.vmem %s7, %s357
        %v359 = vld [vmem:[%s303] sm:$0xf]
        %vm360 = vcmask 1043456
        %v361 = vsel %vm360, %v359, 1.0
        %v362 = vld [vmem:[#allocation4] sm:$0xff]
        %vm363 = vcmask 39936
        %v365 = vsel %vm363, %v362, 0
        %vm367 = vcmask 1044480
        %v369 = vsel %vm367, %v361, 0
        %371 = vmatprep.subr.mxu0 0.0
        %372 = vmatpush1.msra.mxu0 0.0
        %373 = vmatprep.subr.mxu0 0.0
        %374 = vmatpush1.msra.mxu0 0.0
        %375 = vmatprep.subr.mxu0 0.0
        %376 = vmatpush1.msra.mxu0 0.0
        %377 = vmatprep.subr.mxu0 0.0
        %378 = vmatpush1.msra.mxu0 0.0
        %379 = vmatprep.subr.mxu0 0.0
        %380 = vmatpush1.msra.mxu0 0.0
        %381 = vmatprep.subr.mxu0 0.0
        %382 = vmatpush1.msra.mxu0 0.0
        %383 = vmatprep.subr.mxu0 0.0
        %384 = vmatpush1.msra.mxu0 0.0
        %385 = vmatprep.subr.mxu0 0.0
        %386 = vmatpush1.msra.mxu0 0.0
        %387 = vmatprep.subr.mxu0 0.0
        %388 = vmatpush1.msra.mxu0 0.0
        %389 = vmatprep.subr.mxu0 0.0
        %390 = vmatpush1.msra.mxu0 0.0
        %391 = vmatprep.subr.mxu0 0.0
        %392 = vmatpush1.msra.mxu0 0.0
        %393 = vmatprep.subr.mxu0 0.0
        %394 = vmatpush1.msra.mxu0 0.0
        %395 = vmatprep.subr.mxu0 0.0
        %396 = vmatpush1.msra.mxu0 0.0
        %397 = vmatprep.subr.mxu0 0.0
        %398 = vmatpush1.msra.mxu0 0.0
        %399 = vmatprep.subr.mxu0 0.0
        %400 = vmatpush1.msra.mxu0 0.0
        %401 = vmatprep.subr.mxu0 0.0
        %402 = vmatpush1.msra.mxu0 %v369
        %403 = vmatprep.subr.mxu0 0.0
        %404 = vmatpush2.msra.mxu0 0.0
        %405 = vmatprep.subr.mxu0 0.0
        %406 = vmatpush2.msra.mxu0 0.0
        %407 = vmatprep.subr.mxu0 0.0
        %408 = vmatpush2.msra.mxu0 0.0
        %409 = vmatprep.subr.mxu0 0.0
        %410 = vmatpush2.msra.mxu0 0.0
        %411 = vmatprep.subr.mxu0 0.0
        %412 = vmatpush2.msra.mxu0 0.0
        %413 = vmatprep.subr.mxu0 0.0
        %414 = vmatpush2.msra.mxu0 0.0
        %415 = vmatprep.subr.mxu0 0.0
        %416 = vmatpush2.msra.mxu0 0.0
        %417 = vmatprep.subr.mxu0 0.0
        %418 = vmatpush2.msra.mxu0 0.0
        %419 = vmatprep.subr.mxu0 0.0
        %420 = vmatpush2.msra.mxu0 0.0
        %421 = vmatprep.subr.mxu0 0.0
        %422 = vmatpush2.msra.mxu0 0.0
        %423 = vmatprep.subr.mxu0 0.0
        %424 = vmatpush2.msra.mxu0 0.0
        %425 = vmatprep.subr.mxu0 0.0
        %426 = vmatpush2.msra.mxu0 0.0
        %427 = vmatprep.subr.mxu0 0.0
        %428 = vmatpush2.msra.mxu0 0.0
        %429 = vmatprep.subr.mxu0 0.0
        %430 = vmatpush2.msra.mxu0 0.0
        %431 = vmatprep.subr.mxu0 0.0
        %432 = vmatpush2.msra.mxu0 0.0
        %433 = vmatprep.subr.mxu0 0.0
        %434 = vmatpush2.msra.mxu0 0.0
        %435 = vmatprep.mubr.f32.mxu0 0.0
        %436 = vmatmul.mubr.f32.gmra.mxu0 %v365
        %v437 = vpop.f32.mrf.mxu0
        %v438 = vadd.f32 0.0, %v437
        %v439 = vpop.f32.mrf.mxu0
        %440 = vdwg.mxu0
        %v441 = vmax.f32 %v438, 0.0
        %v442 = vld [vmem:[#allocation6] sm:$0xf]
        %v444 = vsel %vm363, %v442, 0
        %446 = vmatprep.subr.mxu0 0.0
        %447 = vmatpush1.msra.mxu0 0.0
        %448 = vmatprep.subr.mxu0 0.0
        %449 = vmatpush1.msra.mxu0 0.0
        %450 = vmatprep.subr.mxu0 0.0
        %451 = vmatpush1.msra.mxu0 0.0
        %452 = vmatprep.subr.mxu0 0.0
        %453 = vmatpush1.msra.mxu0 0.0
        %454 = vmatprep.subr.mxu0 0.0
        %455 = vmatpush1.msra.mxu0 0.0
        %456 = vmatprep.subr.mxu0 0.0
        %457 = vmatpush1.msra.mxu0 0.0
        %458 = vmatprep.subr.mxu0 0.0
        %459 = vmatpush1.msra.mxu0 0.0
        %460 = vmatprep.subr.mxu0 0.0
        %461 = vmatpush1.msra.mxu0 0.0
        %462 = vmatprep.subr.mxu0 0.0
        %463 = vmatpush1.msra.mxu0 0.0
        %464 = vmatprep.subr.mxu0 0.0
        %465 = vmatpush1.msra.mxu0 0.0
        %466 = vmatprep.subr.mxu0 0.0
        %467 = vmatpush1.msra.mxu0 0.0
        %468 = vmatprep.subr.mxu0 0.0
        %469 = vmatpush1.msra.mxu0 0.0
        %470 = vmatprep.subr.mxu0 0.0
        %471 = vmatpush1.msra.mxu0 0.0
        %472 = vmatprep.subr.mxu0 0.0
        %473 = vmatpush1.msra.mxu0 0.0
        %474 = vmatprep.subr.mxu0 0.0
        %475 = vmatpush1.msra.mxu0 0.0
        %476 = vmatprep.subr.mxu0 0.0
        %477 = vmatpush1.msra.mxu0 %v369
        %478 = vmatprep.subr.mxu0 0.0
        %479 = vmatpush2.msra.mxu0 0.0
        %480 = vmatprep.subr.mxu0 0.0
        %481 = vmatpush2.msra.mxu0 0.0
        %482 = vmatprep.subr.mxu0 0.0
        %483 = vmatpush2.msra.mxu0 0.0
        %484 = vmatprep.subr.mxu0 0.0
        %485 = vmatpush2.msra.mxu0 0.0
        %486 = vmatprep.subr.mxu0 0.0
        %487 = vmatpush2.msra.mxu0 0.0
        %488 = vmatprep.subr.mxu0 0.0
        %489 = vmatpush2.msra.mxu0 0.0
        %490 = vmatprep.subr.mxu0 0.0
        %491 = vmatpush2.msra.mxu0 0.0
        %492 = vmatprep.subr.mxu0 0.0
        %493 = vmatpush2.msra.mxu0 0.0
        %494 = vmatprep.subr.mxu0 0.0
        %495 = vmatpush2.msra.mxu0 0.0
        %496 = vmatprep.subr.mxu0 0.0
        %497 = vmatpush2.msra.mxu0 0.0
        %498 = vmatprep.subr.mxu0 0.0
        %499 = vmatpush2.msra.mxu0 0.0
        %500 = vmatprep.subr.mxu0 0.0
        %501 = vmatpush2.msra.mxu0 0.0
        %502 = vmatprep.subr.mxu0 0.0
        %503 = vmatpush2.msra.mxu0 0.0
        %504 = vmatprep.subr.mxu0 0.0
        %505 = vmatpush2.msra.mxu0 0.0
        %506 = vmatprep.subr.mxu0 0.0
        %507 = vmatpush2.msra.mxu0 0.0
        %508 = vmatprep.subr.mxu0 0.0
        %509 = vmatpush2.msra.mxu0 0.0
        %510 = vmatprep.mubr.f32.mxu0 0.0
        %511 = vmatmul.mubr.f32.gmra.mxu0 %v444
        %v512 = vpop.f32.mrf.mxu0
        %v513 = vadd.f32 0.0, %v512
        %v514 = vpop.f32.mrf.mxu0
        %515 = vdwg.mxu0
        %v516 = vmax.f32 %v513, 0.0
        %518 = vrot.lane.b32.xlu0 %v516, 1
        %v519 = vpop.permute.xlu0 %518
        %vm521 = vcmask 7168
        %v522 = vsel %vm521, 0.0, %v519
        %vm523 = vcmask 138240
        %v524 = vsel %vm523, %v522, 0.0
        %v526 = vrot.slane %v524, 4
        %527 = vrot.lane.b32.xlu0 %v526, 127
        %v528 = vpop.permute.xlu0 %527
        %530 = vrot.lane.b32.xlu0 %v524, 126
        %v531 = vpop.permute.xlu0 %530
        %v533 = vsel %vm360, %v524, %v528
        %v534 = vsel %vm360, %v531, 1.0
        %v535 = vld [vmem:[#allocation7] sm:$0xff]
        %vm536 = vcmask 105472
        %v538 = vsel %vm536, %v535, 0
        %v541 = vsel %vm367, %v534, 0
        %543 = vmatprep.subr.mxu0 0.0
        %544 = vmatpush1.msra.mxu0 0.0
        %545 = vmatprep.subr.mxu0 0.0
        %546 = vmatpush1.msra.mxu0 0.0
        %547 = vmatprep.subr.mxu0 0.0
        %548 = vmatpush1.msra.mxu0 0.0
        %549 = vmatprep.subr.mxu0 0.0
        %550 = vmatpush1.msra.mxu0 0.0
        %551 = vmatprep.subr.mxu0 0.0
        %552 = vmatpush1.msra.mxu0 0.0
        %553 = vmatprep.subr.mxu0 0.0
        %554 = vmatpush1.msra.mxu0 0.0
        %555 = vmatprep.subr.mxu0 0.0
        %556 = vmatpush1.msra.mxu0 0.0
        %557 = vmatprep.subr.mxu0 0.0
        %558 = vmatpush1.msra.mxu0 0.0
        %559 = vmatprep.subr.mxu0 0.0
        %560 = vmatpush1.msra.mxu0 0.0
        %561 = vmatprep.subr.mxu0 0.0
        %562 = vmatpush1.msra.mxu0 0.0
        %563 = vmatprep.subr.mxu0 0.0
        %564 = vmatpush1.msra.mxu0 0.0
        %565 = vmatprep.subr.mxu0 0.0
        %566 = vmatpush1.msra.mxu0 0.0
        %567 = vmatprep.subr.mxu0 0.0
        %568 = vmatpush1.msra.mxu0 0.0
        %569 = vmatprep.subr.mxu0 0.0
        %570 = vmatpush1.msra.mxu0 0.0
        %571 = vmatprep.subr.mxu0 0.0
        %572 = vmatpush1.msra.mxu0 %v541
        %573 = vmatprep.subr.mxu0 0.0
        %574 = vmatpush1.msra.mxu0 %v533
        %575 = vmatprep.subr.mxu0 0.0
        %576 = vmatpush2.msra.mxu0 0.0
        %577 = vmatprep.subr.mxu0 0.0
        %578 = vmatpush2.msra.mxu0 0.0
        %579 = vmatprep.subr.mxu0 0.0
        %580 = vmatpush2.msra.mxu0 0.0
        %581 = vmatprep.subr.mxu0 0.0
        %582 = vmatpush2.msra.mxu0 0.0
        %583 = vmatprep.subr.mxu0 0.0
        %584 = vmatpush2.msra.mxu0 0.0
        %585 = vmatprep.subr.mxu0 0.0
        %586 = vmatpush2.msra.mxu0 0.0
        %587 = vmatprep.subr.mxu0 0.0
        %588 = vmatpush2.msra.mxu0 0.0
        %589 = vmatprep.subr.mxu0 0.0
        %590 = vmatpush2.msra.mxu0 0.0
        %591 = vmatprep.subr.mxu0 0.0
        %592 = vmatpush2.msra.mxu0 0.0
        %593 = vmatprep.subr.mxu0 0.0
        %594 = vmatpush2.msra.mxu0 0.0
        %595 = vmatprep.subr.mxu0 0.0
        %596 = vmatpush2.msra.mxu0 0.0
        %597 = vmatprep.subr.mxu0 0.0
        %598 = vmatpush2.msra.mxu0 0.0
        %599 = vmatprep.subr.mxu0 0.0
        %600 = vmatpush2.msra.mxu0 0.0
        %601 = vmatprep.subr.mxu0 0.0
        %602 = vmatpush2.msra.mxu0 0.0
        %603 = vmatprep.subr.mxu0 0.0
        %604 = vmatpush2.msra.mxu0 0.0
        %605 = vmatprep.subr.mxu0 0.0
        %606 = vmatpush2.msra.mxu0 0.0
        %607 = vmatprep.mubr.f32.mxu0 0.0
        %608 = vmatmul.mubr.f32.gmra.mxu0 %v538
        %v609 = vpop.f32.mrf.mxu0
        %v610 = vadd.f32 0.0, %v609
        %v611 = vpop.f32.mrf.mxu0
        %612 = vdwg.mxu0
        %v613 = vmax.f32 %v610, 0.0
        %v614 = vld [vmem:[#allocation9] sm:$0xf]
        %v616 = vsel %vm363, %v614, 0
        %618 = vmatprep.subr.mxu0 0.0
        %619 = vmatpush1.msra.mxu0 0.0
        %620 = vmatprep.subr.mxu0 0.0
        %621 = vmatpush1.msra.mxu0 0.0
        %622 = vmatprep.subr.mxu0 0.0
        %623 = vmatpush1.msra.mxu0 0.0
        %624 = vmatprep.subr.mxu0 0.0
        %625 = vmatpush1.msra.mxu0 0.0
        %626 = vmatprep.subr.mxu0 0.0
        %627 = vmatpush1.msra.mxu0 0.0
        %628 = vmatprep.subr.mxu0 0.0
        %629 = vmatpush1.msra.mxu0 0.0
        %630 = vmatprep.subr.mxu0 0.0
        %631 = vmatpush1.msra.mxu0 0.0
        %632 = vmatprep.subr.mxu0 0.0
        %633 = vmatpush1.msra.mxu0 0.0
        %634 = vmatprep.subr.mxu0 0.0
        %635 = vmatpush1.msra.mxu0 0.0
        %636 = vmatprep.subr.mxu0 0.0
        %637 = vmatpush1.msra.mxu0 0.0
        %638 = vmatprep.subr.mxu0 0.0
        %639 = vmatpush1.msra.mxu0 0.0
        %640 = vmatprep.subr.mxu0 0.0
        %641 = vmatpush1.msra.mxu0 0.0
        %642 = vmatprep.subr.mxu0 0.0
        %643 = vmatpush1.msra.mxu0 0.0
        %644 = vmatprep.subr.mxu0 0.0
        %645 = vmatpush1.msra.mxu0 0.0
        %646 = vmatprep.subr.mxu0 0.0
        %647 = vmatpush1.msra.mxu0 0.0
        %648 = vmatprep.subr.mxu0 0.0
        %649 = vmatpush1.msra.mxu0 %v369
        %650 = vmatprep.subr.mxu0 0.0
        %651 = vmatpush2.msra.mxu0 0.0
        %652 = vmatprep.subr.mxu0 0.0
        %653 = vmatpush2.msra.mxu0 0.0
        %654 = vmatprep.subr.mxu0 0.0
        %655 = vmatpush2.msra.mxu0 0.0
        %656 = vmatprep.subr.mxu0 0.0
        %657 = vmatpush2.msra.mxu0 0.0
        %658 = vmatprep.subr.mxu0 0.0
        %659 = vmatpush2.msra.mxu0 0.0
        %660 = vmatprep.subr.mxu0 0.0
        %661 = vmatpush2.msra.mxu0 0.0
        %662 = vmatprep.subr.mxu0 0.0
        %663 = vmatpush2.msra.mxu0 0.0
        %664 = vmatprep.subr.mxu0 0.0
        %665 = vmatpush2.msra.mxu0 0.0
        %666 = vmatprep.subr.mxu0 0.0
        %667 = vmatpush2.msra.mxu0 0.0
        %668 = vmatprep.subr.mxu0 0.0
        %669 = vmatpush2.msra.mxu0 0.0
        %670 = vmatprep.subr.mxu0 0.0
        %671 = vmatpush2.msra.mxu0 0.0
        %672 = vmatprep.subr.mxu0 0.0
        %673 = vmatpush2.msra.mxu0 0.0
        %674 = vmatprep.subr.mxu0 0.0
        %675 = vmatpush2.msra.mxu0 0.0
        %676 = vmatprep.subr.mxu0 0.0
        %677 = vmatpush2.msra.mxu0 0.0
        %678 = vmatprep.subr.mxu0 0.0
        %679 = vmatpush2.msra.mxu0 0.0
        %680 = vmatprep.subr.mxu0 0.0
        %681 = vmatpush2.msra.mxu0 0.0
        %682 = vmatprep.mubr.f32.mxu0 0.0
        %683 = vmatmul.mubr.f32.gmra.mxu0 %v616
        %v684 = vpop.f32.mrf.mxu0
        %v685 = vadd.f32 0.0, %v684
        %v686 = vpop.f32.mrf.mxu0
        %687 = vdwg.mxu0
        %v688 = vmax.f32 %v685, 0.0
        %690 = vrot.lane.b32.xlu0 %v688, 2
        %v691 = vpop.permute.xlu0 %690
        %vm693 = vcmask 15360
        %v694 = vsel %vm693, 0.0, %v691
        %vm695 = vcmask 146432
        %v696 = vsel %vm695, %v694, 0.0
        %v698 = vrot.slane %v696, 4
        %699 = vrot.lane.b32.xlu0 %v698, 127
        %v700 = vpop.permute.xlu0 %699
        %702 = vrot.lane.b32.xlu0 %v696, 126
        %v703 = vpop.permute.xlu0 %702
        %705 = vrot.lane.b32.xlu0 %v698, 125
        %v706 = vpop.permute.xlu0 %705
        %708 = vrot.lane.b32.xlu0 %v696, 124
        %v709 = vpop.permute.xlu0 %708
        %v711 = vsel %vm360, %v696, %v700
        %v712 = vsel %vm360, %v703, %v706
        %v713 = vsel %vm360, %v709, 1.0
        %v714 = vld [vmem:[%s5] sm:$0xff]
        %vm715 = vcmask 171008
        %v717 = vsel %vm715, %v714, 0
        %v720 = vsel %vm367, %v713, 0
        %722 = vmatprep.subr.mxu0 0.0
        %723 = vmatpush1.msra.mxu0 0.0
        %724 = vmatprep.subr.mxu0 0.0
        %725 = vmatpush1.msra.mxu0 0.0
        %726 = vmatprep.subr.mxu0 0.0
        %727 = vmatpush1.msra.mxu0 0.0
        %728 = vmatprep.subr.mxu0 0.0
        %729 = vmatpush1.msra.mxu0 0.0
        %730 = vmatprep.subr.mxu0 0.0
        %731 = vmatpush1.msra.mxu0 0.0
        %732 = vmatprep.subr.mxu0 0.0
        %733 = vmatpush1.msra.mxu0 0.0
        %734 = vmatprep.subr.mxu0 0.0
        %735 = vmatpush1.msra.mxu0 0.0
        %736 = vmatprep.subr.mxu0 0.0
        %737 = vmatpush1.msra.mxu0 0.0
        %738 = vmatprep.subr.mxu0 0.0
        %739 = vmatpush1.msra.mxu0 0.0
        %740 = vmatprep.subr.mxu0 0.0
        %741 = vmatpush1.msra.mxu0 0.0
        %742 = vmatprep.subr.mxu0 0.0
        %743 = vmatpush1.msra.mxu0 0.0
        %744 = vmatprep.subr.mxu0 0.0
        %745 = vmatpush1.msra.mxu0 0.0
        %746 = vmatprep.subr.mxu0 0.0
        %747 = vmatpush1.msra.mxu0 0.0
        %748 = vmatprep.subr.mxu0 0.0
        %749 = vmatpush1.msra.mxu0 %v720
        %750 = vmatprep.subr.mxu0 0.0
        %751 = vmatpush1.msra.mxu0 %v712
        %752 = vmatprep.subr.mxu0 0.0
        %753 = vmatpush1.msra.mxu0 %v711
        %754 = vmatprep.subr.mxu0 0.0
        %755 = vmatpush2.msra.mxu0 0.0
        %756 = vmatprep.subr.mxu0 0.0
        %757 = vmatpush2.msra.mxu0 0.0
        %758 = vmatprep.subr.mxu0 0.0
        %759 = vmatpush2.msra.mxu0 0.0
        %760 = vmatprep.subr.mxu0 0.0
        %761 = vmatpush2.msra.mxu0 0.0
        %762 = vmatprep.subr.mxu0 0.0
        %763 = vmatpush2.msra.mxu0 0.0
        %764 = vmatprep.subr.mxu0 0.0
        %765 = vmatpush2.msra.mxu0 0.0
        %766 = vmatprep.subr.mxu0 0.0
        %767 = vmatpush2.msra.mxu0 0.0
        %768 = vmatprep.subr.mxu0 0.0
        %769 = vmatpush2.msra.mxu0 0.0
        %770 = vmatprep.subr.mxu0 0.0
        %771 = vmatpush2.msra.mxu0 0.0
        %772 = vmatprep.subr.mxu0 0.0
        %773 = vmatpush2.msra.mxu0 0.0
        %774 = vmatprep.subr.mxu0 0.0
        %775 = vmatpush2.msra.mxu0 0.0
        %776 = vmatprep.subr.mxu0 0.0
        %777 = vmatpush2.msra.mxu0 0.0
        %778 = vmatprep.subr.mxu0 0.0
        %779 = vmatpush2.msra.mxu0 0.0
        %780 = vmatprep.subr.mxu0 0.0
        %781 = vmatpush2.msra.mxu0 0.0
        %782 = vmatprep.subr.mxu0 0.0
        %783 = vmatpush2.msra.mxu0 0.0
        %784 = vmatprep.subr.mxu0 0.0
        %785 = vmatpush2.msra.mxu0 0.0
        %786 = vmatprep.mubr.f32.mxu0 0.0
        %787 = vmatmul.mubr.f32.gmra.mxu0 %v717
        %v788 = vpop.f32.mrf.mxu0
        %v789 = vadd.f32 0.0, %v788
        %v790 = vpop.f32.mrf.mxu0
        %791 = vdwg.mxu0
        %v792 = vmax.f32 %v789, 0.0
        %794 = vrot.lane.b32.xlu0 %v359, 1
        %v795 = vpop.permute.xlu0 %794
        %v797 = vsel %vm521, -inf, %v795
        %v798 = vsel %vm523, %v797, -inf
        %800 = vrot.lane.b32.xlu0 %v798, 127
        %v801 = vpop.permute.xlu0 %800
        %v803 = vmax.f32 %v798, %v801
        %804 = vrot.lane.b32.xlu0 %v798, 126
        %v805 = vpop.permute.xlu0 %804
        %v807 = vmax.f32 %v803, %v805
        %v808 = vsel %vm360, %v807, 1.0
        %v809 = vld [vmem:[#allocation10] sm:$0xff]
        %v811 = vsel %vm363, %v809, 0
        %v814 = vsel %vm367, %v808, 0
        %816 = vmatprep.subr.mxu0 0.0
        %817 = vmatpush1.msra.mxu0 0.0
        %818 = vmatprep.subr.mxu0 0.0
        %819 = vmatpush1.msra.mxu0 0.0
        %820 = vmatprep.subr.mxu0 0.0
        %821 = vmatpush1.msra.mxu0 0.0
        %822 = vmatprep.subr.mxu0 0.0
        %823 = vmatpush1.msra.mxu0 0.0
        %824 = vmatprep.subr.mxu0 0.0
        %825 = vmatpush1.msra.mxu0 0.0
        %826 = vmatprep.subr.mxu0 0.0
        %827 = vmatpush1.msra.mxu0 0.0
        %828 = vmatprep.subr.mxu0 0.0
        %829 = vmatpush1.msra.mxu0 0.0
        %830 = vmatprep.subr.mxu0 0.0
        %831 = vmatpush1.msra.mxu0 0.0
        %832 = vmatprep.subr.mxu0 0.0
        %833 = vmatpush1.msra.mxu0 0.0
        %834 = vmatprep.subr.mxu0 0.0
        %835 = vmatpush1.msra.mxu0 0.0
        %836 = vmatprep.subr.mxu0 0.0
        %837 = vmatpush1.msra.mxu0 0.0
        %838 = vmatprep.subr.mxu0 0.0
        %839 = vmatpush1.msra.mxu0 0.0
        %840 = vmatprep.subr.mxu0 0.0
        %841 = vmatpush1.msra.mxu0 0.0
        %842 = vmatprep.subr.mxu0 0.0
        %843 = vmatpush1.msra.mxu0 0.0
        %844 = vmatprep.subr.mxu0 0.0
        %845 = vmatpush1.msra.mxu0 0.0
        %846 = vmatprep.subr.mxu0 0.0
        %847 = vmatpush1.msra.mxu0 %v814
        %848 = vmatprep.subr.mxu0 0.0
        %849 = vmatpush2.msra.mxu0 0.0
        %850 = vmatprep.subr.mxu0 0.0
        %851 = vmatpush2.msra.mxu0 0.0
        %852 = vmatprep.subr.mxu0 0.0
        %853 = vmatpush2.msra.mxu0 0.0
        %854 = vmatprep.subr.mxu0 0.0
        %855 = vmatpush2.msra.mxu0 0.0
        %856 = vmatprep.subr.mxu0 0.0
        %857 = vmatpush2.msra.mxu0 0.0
        %858 = vmatprep.subr.mxu0 0.0
        %859 = vmatpush2.msra.mxu0 0.0
        %860 = vmatprep.subr.mxu0 0.0
        %861 = vmatpush2.msra.mxu0 0.0
        %862 = vmatprep.subr.mxu0 0.0
        %863 = vmatpush2.msra.mxu0 0.0
        %864 = vmatprep.subr.mxu0 0.0
        %865 = vmatpush2.msra.mxu0 0.0
        %866 = vmatprep.subr.mxu0 0.0
        %867 = vmatpush2.msra.mxu0 0.0
        %868 = vmatprep.subr.mxu0 0.0
        %869 = vmatpush2.msra.mxu0 0.0
        %870 = vmatprep.subr.mxu0 0.0
        %871 = vmatpush2.msra.mxu0 0.0
        %872 = vmatprep.subr.mxu0 0.0
        %873 = vmatpush2.msra.mxu0 0.0
        %874 = vmatprep.subr.mxu0 0.0
        %875 = vmatpush2.msra.mxu0 0.0
        %876 = vmatprep.subr.mxu0 0.0
        %877 = vmatpush2.msra.mxu0 0.0
        %878 = vmatprep.subr.mxu0 0.0
        %879 = vmatpush2.msra.mxu0 0.0
        %880 = vmatprep.mubr.f32.mxu0 0.0
        %881 = vmatmul.mubr.f32.gmra.mxu0 %v811
        %v882 = vpop.f32.mrf.mxu0
        %v883 = vadd.f32 0.0, %v882
        %v884 = vpop.f32.mrf.mxu0
        %885 = vdwg.mxu0
        %v886 = vmax.f32 %v883, 0.0
        %vm887 = vcmask 130048
        %888 = vst.msk [vmem:[%s358] sm:$0xff] %vm887, %v441
        %889 = vst.msk [vmem:[%s358 + $0x8] sm:$0xff] %vm887, %v613
        %890 = vst.msk [vmem:[%s358 + $0x10] sm:$0xff] %vm887, %v792
        %891 = vst.msk [vmem:[%s358 + $0x18] sm:$0xff] %vm887, %v886
        %p892 = scmp.lt.s32.totalorder %s24, 1
        %s893 = scalar_select %p892, %s24, 1
        %s894 = smul.addr %s893, 4
        %s895 = smul.addr %s894, 8
        %s896 = scalar_lea.vmem %s7, %s895
        // Predicated region
        $region73: #{tpu_custom_call.1} parent=47 // pred_check
          %p897 = pneg %p194
        $region74: #{tpu_custom_call.1} parent=47 // pred_check_branch
          %899 = sbr.rel (%p897) target = $region76
        $region75: #{tpu_custom_call.1} parent=47 // pred_region
          _
        $region76: #{tpu_custom_call.1} parent=47 // pred_fallthru
          _
      $region48: #{tpu_custom_call.1} parent=5 // pred_fallthru
        _
      %p900 = scmp.le.s32.totalorder 2, %s19
      // Predicated region
      $region77: #{tpu_custom_call.1} parent=5 // pred_check
        %p901 = pneg %p900
      $region78: #{tpu_custom_call.1} parent=5 // pred_check_branch
        %903 = sbr.rel (%p901) target = $region80
      $region79: #{tpu_custom_call.1} parent=5 // pred_region
        %s904 = ssub.s32 %s19, 2
        // Predicated region
        $region81: #{tpu_custom_call.1} parent=79 // pred_check
          %p905 = pneg %p200
        $region82: #{tpu_custom_call.1} parent=79 // pred_check_branch
          %907 = sbr.rel (%p905) target = $region84
        $region83: #{tpu_custom_call.1} parent=79 // pred_region
          %p908 = scmp.lt.s32.totalorder %s25, 1
          %s909 = scalar_select %p908, %s25, 1
          %s910 = smul.addr %s909, 4
          %s911 = smul.addr %s910, 8
          %s912 = scalar_lea.vmem %s7, %s911
        $region84: #{tpu_custom_call.1} parent=79 // pred_fallthru
          _
      $region80: #{tpu_custom_call.1} parent=5 // pred_fallthru
        _
    $region6: #{tpu_custom_call.1} parent=1 // loop_footer
      %s23 = sadd.s32 1, %s19
    $region7: #{tpu_custom_call.1} parent=1 // loop_footer_branch
      %18 = sbr.rel target = $region3
    $region8: #{tpu_custom_call.1} parent=1 // loop_exit
      _
    %913 = vsyncpa [#allocation3], 1
    %s914 = scalar_lea.sflag [#allocation3], 1
    %915 = vsyncpa %s914, 1
    %916 = vsyncpa [#allocation5], 1
    %917 = vsyncpa [#allocation8], 1
    %918 = vsyncpa [#allocation11], 1

</llo_original>
